<compile_context>
chip_gen: v6e
topology: v6e:2x2x1
jax: 0.10.0
libtpu: 0.0.40
codegen_flags: <defaults>
</compile_context>

<pallas_src>
import numpy as np
import jax
import jax.numpy as jnp
from jax import lax
from jax.experimental import pallas as pl
from jax.experimental.pallas import tpu as pltpu

N = 128  # fixed by the module's assertion (mask.size(-1) == 128)


# ----------------------------- Pallas kernel -------------------------------
def _precond_kernel(scale_ref, eps_ref, dd_ref, out_ref):
    """One slab of TB batch elements per grid step.

    scale_ref : SMEM (1,) float32
    eps_ref   : VMEM (TB, N, N)  reconstructed L-mask entries
    dd_ref    : VMEM (TB, N, N)  reconstructed DD-mask entries
    out_ref   : VMEM (TB, N, N)  preconditioned matrices
    """
    scale = scale_ref[0]
    eps = eps_ref[...]          # (TB, N, N)
    dd = dd_ref[...]            # (TB, N, N)

    # identity built ONCE per grid step (not per batch element)
    row = lax.broadcasted_iota(jnp.int32, (N, N), 0)
    col = lax.broadcasted_iota(jnp.int32, (N, N), 1)
    eye = (row == col).astype(eps.dtype)

    L = eps * scale + eye[None]                       # (TB, N, N)

    # real dtype => conj() is a no-op; batched NT contraction expressed
    # directly (no materialized transpose):  LL[b] = L[b] @ L[b].T
    LL = lax.dot_general(
        L, L,
        dimension_numbers=(((2,), (2,)), ((0,), (0,))),
        preferred_element_type=jnp.float32)

    # out[b] = LL[b] @ DD[b]
    out = lax.dot_general(
        LL, dd,
        dimension_numbers=(((2,), (1,)), ((0,), (0,))),
        preferred_element_type=jnp.float32)

    out_ref[...] = out.astype(out_ref.dtype)


def _pick_tb_and_vmem(B):
    """Per-generation slab size and scoped-VMEM limit."""
    try:
        kind = jax.devices()[0].device_kind.lower()
    except Exception:
        kind = ""
    if "v6" in kind:
        tb = 64        # v6e: 32 MiB default scoped / 128 MiB physical
    else:
        tb = 32        # v5e (16 MiB default scoped) / v7x (64 MiB total) / other
    tb = max(1, min(tb, B))
    mat_bytes = N * N * 4
    # 3 I/O arrays double-buffered + in-kernel temporaries (L, LL, out) + headroom
    vmem = 3 * tb * mat_bytes * 2 + 3 * tb * mat_bytes + (8 << 20)
    vmem = max(vmem, 32 << 20)
    vmem = min(vmem, 100 << 20)
    return tb, vmem


def precond_mat_pallas(eps, dd, scale, tb=None):
    """eps, dd: (B, N, N) float32; scale: python float / 0-d scalar."""
    B = eps.shape[0]
    auto_tb, vmem_limit = _pick_tb_and_vmem(B)
    if tb is None:
        tb = auto_tb
    tb = max(1, min(tb, B))

    # pad batch to a multiple of the slab size (zero pad is exact: L=I, out=0)
    B_pad = ((B + tb - 1) // tb) * tb
    if B_pad != B:
        pad = ((0, B_pad - B), (0, 0), (0, 0))
        eps = jnp.pad(eps, pad)
        dd = jnp.pad(dd, pad)

    scale_arr = jnp.asarray([scale], dtype=jnp.float32)
    grid = (B_pad // tb,)

    cost = pl.CostEstimate(
        flops=4 * B_pad * N ** 3,                 # two N^3 matmuls per matrix
        transcendentals=0,
        bytes_accessed=3 * B_pad * N * N * 4)

    out = pl.pallas_call(
        _precond_kernel,
        out_shape=jax.ShapeDtypeStruct((B_pad, N, N), jnp.float32),
        grid=grid,
        in_specs=[
            pl.BlockSpec(memory_space=pltpu.MemorySpace.SMEM),
            pl.BlockSpec((tb, N, N), lambda b: (b, 0, 0)),
            pl.BlockSpec((tb, N, N), lambda b: (b, 0, 0)),
        ],
        out_specs=pl.BlockSpec((tb, N, N), lambda b: (b, 0, 0)),
        compiler_params=pltpu.CompilerParams(
            dimension_semantics=("parallel",),
            vmem_limit_bytes=int(vmem_limit)),
        cost_estimate=cost,
    )(scale_arr, eps, dd)

    return out[:B]


# ------------------------------- glue (JAX) --------------------------------
def reconstruct_mat(entries, mask_np):
    """torch: M = zeros(B,128,128); M[:, mask] = entries  (row-major order)."""
    # TODO(synk): for very large B consider passing packed entries + index
    # tables into the kernel instead of a dense (B,128,128) HBM round-trip.
    rows, cols = np.nonzero(mask_np)  # row-major, matches torch boolean indexing
    M = jnp.zeros((entries.shape[0], N, N), dtype=entries.dtype)
    return M.at[:, rows, cols].set(entries)


def mat_condition_number_loss(DD_entries, L_entries, scale, mask_dd, mask_l):
    dd = reconstruct_mat(DD_entries, mask_dd)
    eps = reconstruct_mat(L_entries, mask_l)
    mat = precond_mat_pallas(eps, dd, scale)
    # TODO(synk): torch.linalg.svd has no Pallas equivalent; condition-number
    # reduction done with XLA's SVD outside the kernel.
    s = jnp.linalg.svd(mat, compute_uv=False)      # descending singular values
    cond_num = s[..., 0] / s[..., -1]
    return jnp.mean(cond_num, axis=0)


# pure-JAX reference for the part implemented in Pallas
def _precond_ref(eps, dd, scale):
    L = eps * scale + jnp.eye(N, dtype=eps.dtype)[None]
    LL = jnp.einsum("bij,bkj->bik", L, L)
    return jnp.einsum("bij,bjk->bik", LL, dd)


if __name__ == "__main__":
    B = 2
    scale = 0.1

    # deterministic masks (128x128 booleans), stand-ins for mask['DD'], mask['L']
    idx = np.arange(N)
    mask_dd = np.abs(idx[:, None] - idx[None, :]) <= 1          # tridiagonal
    mask_l = (idx[:, None] - idx[None, :] >= 1) & \
             (idx[:, None] - idx[None, :] <= 2)                 # strict lower band

    n_dd = int(mask_dd.sum())
    n_l = int(mask_l.sum())

    key = jax.random.PRNGKey(0)
    k1, k2 = jax.random.split(key)
    DD_entries = jax.random.normal(k1, (B, n_dd), dtype=jnp.float32)
    L_entries = jax.random.normal(k2, (B, n_l), dtype=jnp.float32) * 0.05

    # check the Pallas-computed preconditioned matrix against the JAX reference
    dd = reconstruct_mat(DD_entries, mask_dd)
    eps = reconstruct_mat(L_entries, mask_l)
    mat_pallas = jax.block_until_ready(precond_mat_pallas(eps, dd, scale))
    mat_ref = _precond_ref(eps, dd, scale)
    np.testing.assert_allclose(np.asarray(mat_pallas), np.asarray(mat_ref),
                               rtol=1e-4, atol=1e-4)

    loss = mat_condition_number_loss(DD_entries, L_entries, scale,
                                     mask_dd, mask_l)
    jax.block_until_ready(loss)
    print("KERNEL_OK")
</pallas_src>

<mosaic_0001>
module attributes {stable_mosaic.version = 11 : i64} {
  func.func @_precond_kernel(%arg0: i32, %arg1: memref<1xf32, #tpu.memory_space<smem>>, %arg2: memref<2x128x128xf32, #tpu.memory_space<vmem>>, %arg3: memref<2x128x128xf32, #tpu.memory_space<vmem>>, %arg4: memref<2x128x128xf32, #tpu.memory_space<vmem>>) attributes {dimension_semantics = [#tpu.dimension_semantics<parallel>], iteration_bounds = array<i64: 1>, scalar_prefetch = 0 : i64, scratch_operands = 0 : i64, tpu.core_type = #tpu.core_type<tc>, window_params = [{transform_indices = @transform_0, window_bounds = array<i64: 1>}, {transform_indices = @transform_1, window_bounds = array<i64: 2, 128, 128>}, {transform_indices = @transform_2, window_bounds = array<i64: 2, 128, 128>}, {transform_indices = @transform_3, window_bounds = array<i64: 2, 128, 128>}]} {
    %c0 = arith.constant 0 : index
    %0 = memref.load %arg1[%c0] : memref<1xf32, #tpu.memory_space<smem>>
    %c0_0 = arith.constant 0 : index
    %c0_1 = arith.constant 0 : index
    %c0_2 = arith.constant 0 : index
    %1 = vector.load %arg2[%c0_0, %c0_1, %c0_2] : memref<2x128x128xf32, #tpu.memory_space<vmem>>, vector<2x128x128xf32>
    %c0_3 = arith.constant 0 : index
    %c0_4 = arith.constant 0 : index
    %c0_5 = arith.constant 0 : index
    %2 = vector.load %arg3[%c0_3, %c0_4, %c0_5] : memref<2x128x128xf32, #tpu.memory_space<vmem>>, vector<2x128x128xf32>
    %3 = tpu.iota {dimensions = array<i32: 0>} : vector<128x128xi32>
    %4 = tpu.iota {dimensions = array<i32: 1>} : vector<128x128xi32>
    %5 = arith.cmpi eq, %3, %4 : vector<128x128xi32>
    %6 = arith.extui %5 : vector<128x128xi1> to vector<128x128xi32>
    %7 = arith.sitofp %6 : vector<128x128xi32> to vector<128x128xf32>
    %8 = vector.broadcast %0 : f32 to vector<2x128x128xf32>
    %9 = arith.mulf %1, %8 : vector<2x128x128xf32>
    %10 = vector.shape_cast %7 : vector<128x128xf32> to vector<1x128x128xf32>
    %11 = vector.broadcast %10 : vector<1x128x128xf32> to vector<2x128x128xf32>
    %12 = arith.addf %9, %11 : vector<2x128x128xf32>
    %cst = arith.constant dense<0.000000e+00> : vector<2x128x128xf32>
    %13 = tpu.matmul %12, %12, %cst {dimension_numbers = #tpu.dot_dimension_numbers<[2], [2], [1], [1], [0, 0, 0, 1, 1, 1], [0], [0]>} : vector<2x128x128xf32>, vector<2x128x128xf32>, vector<2x128x128xf32> -> vector<2x128x128xf32>
    %cst_6 = arith.constant dense<0.000000e+00> : vector<2x128x128xf32>
    %14 = tpu.matmul %13, %2, %cst_6 {dimension_numbers = #tpu.dot_dimension_numbers<[2], [1], [1], [2], [0, 0, 0, 1, 1, 2], [0], [0]>} : vector<2x128x128xf32>, vector<2x128x128xf32>, vector<2x128x128xf32> -> vector<2x128x128xf32>
    %c0_7 = arith.constant 0 : index
    %c0_8 = arith.constant 0 : index
    %c0_9 = arith.constant 0 : index
    %15 = vector.load %arg4[%c0_7, %c0_8, %c0_9] : memref<2x128x128xf32, #tpu.memory_space<vmem>>, vector<2x128x128xf32>
    tpu.vector_store %arg4[%c0_7, %c0_8, %c0_9], %14 {strides = array<i32>} : memref<2x128x128xf32, #tpu.memory_space<vmem>>, vector<2x128x128xf32>,
    return
  }
  func.func @transform_0(%arg0: i32) -> i32 {
    %c0_i32 = arith.constant 0 : i32
    %c0_i32_0 = arith.constant 0 : i32
    return %c0_i32 : i32
  }
  func.func @transform_1(%arg0: i32) -> (i32, i32, i32) {
    %c0_i32 = arith.constant 0 : i32
    %c0_i32_0 = arith.constant 0 : i32
    %c0_i32_1 = arith.constant 0 : i32
    return %arg0, %c0_i32, %c0_i32_0 : i32, i32, i32
  }
  func.func @transform_2(%arg0: i32) -> (i32, i32, i32) {
    %c0_i32 = arith.constant 0 : i32
    %c0_i32_0 = arith.constant 0 : i32
    %c0_i32_1 = arith.constant 0 : i32
    return %arg0, %c0_i32, %c0_i32_0 : i32, i32, i32
  }
  func.func @transform_3(%arg0: i32) -> (i32, i32, i32) {
    %c0_i32 = arith.constant 0 : i32
    %c0_i32_0 = arith.constant 0 : i32
    %c0_i32_1 = arith.constant 0 : i32
    return %arg0, %c0_i32, %c0_i32_0 : i32, i32, i32
  }
}

</mosaic_0001>

<llo_original>
// kernel: tpu_custom_call.1
$region0: #{tpu_custom_call.1}
  #allocation0 [shape = 'u32[]', space=smem, size = 0x4, offset = 0x4, fixed_abs, tag = 'smem constant byte address 0x4 - core index']
  #allocation1 [shape = 'u32[144,128]{1,0:T(1,128)}', space=vmem, size = 0x12000, scoped, tag = 'internal scratch']
  #allocation2 [shape = 'f32[1]{0:T(128)S(6)}', space=smem, size = 0x200, scoped, tag = 'scoped memory for tpu_custom_call.1']
  %s0 = inlined_call_operand.<no memory space> [shape: f32[1], index: 0, kind: input, shape index: {}]
  %s1 = inlined_call_operand.hbm [shape: f32[2,128,128], index: 1, kind: input, shape index: {}]
  %s2 = inlined_call_operand.hbm [shape: f32[2,128,128], index: 2, kind: input, shape index: {}]
  %s3 = inlined_call_operand.hbm [shape: f32[2,128,128], index: 3, kind: output, shape index: {}]
  %s4 = sld [smem:[#allocation0]]
  $region30: #{tpu_custom_call.1} parent=0
    _
  %s6 = ssub.s32 1, %s4
  %s7 = scalar_select 0, %s6, %s4
  %8 = sst [smem:[#allocation2]] %s0
  $region1: #{tpu_custom_call.1} parent=0
    #allocation3 [shape = 'u8[131072]{0}', space=vmem, size = 0x20000, scoped, tag = 'input window, operand 1, single buffered']
    #allocation4 [shape = 's32[1]{0}', space=sflag, size = 0x4, scoped, tag = 'scoped memory for tpu_custom_call.1']
    #allocation5 [shape = 's32[1]{0}', space=sflag, size = 0x4, scoped, tag = 'scoped memory for tpu_custom_call.1']
    #allocation6 [shape = 'u8[131072]{0}', space=vmem, size = 0x20000, scoped, tag = 'input window, operand 2, single buffered']
    #allocation7 [shape = 's32[1]{0}', space=sflag, size = 0x4, scoped, tag = 'scoped memory for tpu_custom_call.1']
    #allocation8 [shape = 'u8[131072]{0}', space=vmem, size = 0x20000, scoped, tag = 'output window, operand 0, single buffered']
    %9 = vsyncpa [#allocation4], 0
    %10 = vsyncpa [#allocation7], 0
    %11 = vsyncpa [#allocation5], 0
    // Predicated region
    $region2: #{tpu_custom_call.1} parent=1 // pred_check
      _
    $region3: #{tpu_custom_call.1} parent=1 // pred_check_branch
      %13 = sbr.rel (0) target = $region5
    $region4: #{tpu_custom_call.1} parent=1 // pred_region
      _
    $region5: #{tpu_custom_call.1} parent=1 // pred_fallthru
      _
    // Predicated region
    $region6: #{tpu_custom_call.1} parent=1 // pred_check
      _
    $region7: #{tpu_custom_call.1} parent=1 // pred_check_branch
      %15 = sbr.rel (0) target = $region9
    $region8: #{tpu_custom_call.1} parent=1 // pred_region
      %s17 = ssub.s32 4096, 4096
      %18 = vsyncadd [#allocation4], %s17
      %s19 = sshll.u32 [#allocation3], 4
      %s20 = int_to_ptr.vmem [resolvable:$true] %s19
      %25 = dma.hbm_to_vmem [thread:$0]  %s1, 4096, %s20, [#allocation4], 128, 128, 8
    $region9: #{tpu_custom_call.1} parent=1 // pred_fallthru
      _
    // Predicated region
    $region10: #{tpu_custom_call.1} parent=1 // pred_check
      _
    $region11: #{tpu_custom_call.1} parent=1 // pred_check_branch
      %27 = sbr.rel (0) target = $region13
    $region12: #{tpu_custom_call.1} parent=1 // pred_region
      %s29 = ssub.s32 4096, 4096
      %30 = vsyncadd [#allocation7], %s29
      %s31 = sshll.u32 [#allocation6], 4
      %s32 = int_to_ptr.vmem [resolvable:$true] %s31
      %37 = dma.hbm_to_vmem [thread:$0]  %s2, 4096, %s32, [#allocation7], 128, 128, 8
    $region13: #{tpu_custom_call.1} parent=1 // pred_fallthru
      _
    // Predicated region
    $region14: #{tpu_custom_call.1} parent=1 // pred_check
      _
    $region15: #{tpu_custom_call.1} parent=1 // pred_check_branch
      %39 = sbr.rel (0) target = $region17
    $region16: #{tpu_custom_call.1} parent=1 // pred_region
      %40 = dma.done [#allocation4], 4096
    $region17: #{tpu_custom_call.1} parent=1 // pred_fallthru
      _
    // Predicated region
    $region18: #{tpu_custom_call.1} parent=1 // pred_check
      _
    $region19: #{tpu_custom_call.1} parent=1 // pred_check_branch
      %42 = sbr.rel (0) target = $region21
    $region20: #{tpu_custom_call.1} parent=1 // pred_region
      %43 = dma.done [#allocation7], 4096
    $region21: #{tpu_custom_call.1} parent=1 // pred_fallthru
      _
    %s44 = sld [smem:[#allocation2]]
    %v45 = vld [vmem:[#allocation3] sm:$0xff]
    %v46 = vld [vmem:[#allocation3 + $0x8] sm:$0xff]
    %v47 = vld [vmem:[#allocation3 + $0x10] sm:$0xff]
    %v48 = vld [vmem:[#allocation3 + $0x18] sm:$0xff]
    %v49 = vld [vmem:[#allocation3 + $0x20] sm:$0xff]
    %v50 = vld [vmem:[#allocation3 + $0x28] sm:$0xff]
    %v51 = vld [vmem:[#allocation3 + $0x30] sm:$0xff]
    %v52 = vld [vmem:[#allocation3 + $0x38] sm:$0xff]
    %v53 = vld [vmem:[#allocation3 + $0x40] sm:$0xff]
    %v54 = vld [vmem:[#allocation3 + $0x48] sm:$0xff]
    %v55 = vld [vmem:[#allocation3 + $0x50] sm:$0xff]
    %v56 = vld [vmem:[#allocation3 + $0x58] sm:$0xff]
    %v57 = vld [vmem:[#allocation3 + $0x60] sm:$0xff]
    %v58 = vld [vmem:[#allocation3 + $0x68] sm:$0xff]
    %v59 = vld [vmem:[#allocation3 + $0x70] sm:$0xff]
    %v60 = vld [vmem:[#allocation3 + $0x78] sm:$0xff]
    %v61 = vld [vmem:[#allocation3 + $0x80] sm:$0xff]
    %v62 = vld [vmem:[#allocation3 + $0x88] sm:$0xff]
    %v63 = vld [vmem:[#allocation3 + $0x90] sm:$0xff]
    %v64 = vld [vmem:[#allocation3 + $0x98] sm:$0xff]
    %v65 = vld [vmem:[#allocation3 + $0xa0] sm:$0xff]
    %v66 = vld [vmem:[#allocation3 + $0xa8] sm:$0xff]
    %v67 = vld [vmem:[#allocation3 + $0xb0] sm:$0xff]
    %v68 = vld [vmem:[#allocation3 + $0xb8] sm:$0xff]
    %v69 = vld [vmem:[#allocation3 + $0xc0] sm:$0xff]
    %v70 = vld [vmem:[#allocation3 + $0xc8] sm:$0xff]
    %v71 = vld [vmem:[#allocation3 + $0xd0] sm:$0xff]
    %v72 = vld [vmem:[#allocation3 + $0xd8] sm:$0xff]
    %v73 = vld [vmem:[#allocation3 + $0xe0] sm:$0xff]
    %v74 = vld [vmem:[#allocation3 + $0xe8] sm:$0xff]
    %v75 = vld [vmem:[#allocation3 + $0xf0] sm:$0xff]
    %v76 = vld [vmem:[#allocation3 + $0xf8] sm:$0xff]
    %v77 = vld [vmem:[#allocation6] sm:$0xff]
    %v78 = vld [vmem:[#allocation6 + $0x8] sm:$0xff]
    %v79 = vld [vmem:[#allocation6 + $0x10] sm:$0xff]
    %v80 = vld [vmem:[#allocation6 + $0x18] sm:$0xff]
    %v81 = vld [vmem:[#allocation6 + $0x20] sm:$0xff]
    %v82 = vld [vmem:[#allocation6 + $0x28] sm:$0xff]
    %v83 = vld [vmem:[#allocation6 + $0x30] sm:$0xff]
    %v84 = vld [vmem:[#allocation6 + $0x38] sm:$0xff]
    %v85 = vld [vmem:[#allocation6 + $0x40] sm:$0xff]
    %v86 = vld [vmem:[#allocation6 + $0x48] sm:$0xff]
    %v87 = vld [vmem:[#allocation6 + $0x50] sm:$0xff]
    %v88 = vld [vmem:[#allocation6 + $0x58] sm:$0xff]
    %v89 = vld [vmem:[#allocation6 + $0x60] sm:$0xff]
    %v90 = vld [vmem:[#allocation6 + $0x68] sm:$0xff]
    %v91 = vld [vmem:[#allocation6 + $0x70] sm:$0xff]
    %v92 = vld [vmem:[#allocation6 + $0x78] sm:$0xff]
    %v93 = vld [vmem:[#allocation6 + $0x80] sm:$0xff]
    %v94 = vld [vmem:[#allocation6 + $0x88] sm:$0xff]
    %v95 = vld [vmem:[#allocation6 + $0x90] sm:$0xff]
    %v96 = vld [vmem:[#allocation6 + $0x98] sm:$0xff]
    %v97 = vld [vmem:[#allocation6 + $0xa0] sm:$0xff]
    %v98 = vld [vmem:[#allocation6 + $0xa8] sm:$0xff]
    %v99 = vld [vmem:[#allocation6 + $0xb0] sm:$0xff]
    %v100 = vld [vmem:[#allocation6 + $0xb8] sm:$0xff]
    %v101 = vld [vmem:[#allocation6 + $0xc0] sm:$0xff]
    %v102 = vld [vmem:[#allocation6 + $0xc8] sm:$0xff]
    %v103 = vld [vmem:[#allocation6 + $0xd0] sm:$0xff]
    %v104 = vld [vmem:[#allocation6 + $0xd8] sm:$0xff]
    %v105 = vld [vmem:[#allocation6 + $0xe0] sm:$0xff]
    %v106 = vld [vmem:[#allocation6 + $0xe8] sm:$0xff]
    %v107 = vld [vmem:[#allocation6 + $0xf0] sm:$0xff]
    %v108 = vld [vmem:[#allocation6 + $0xf8] sm:$0xff]
    %v109 = vlaneseq
    %v110 = vshrl.u32 %v109, 7
    %v111 = vadd.s32 %v110, 8
    %v112 = vadd.s32 %v110, 16
    %v113 = vadd.s32 %v110, 24
    %v114 = vadd.s32 %v110, 32
    %v115 = vadd.s32 %v110, 40
    %v116 = vadd.s32 %v110, 48
    %v117 = vadd.s32 %v110, 56
    %v118 = vadd.s32 %v110, 64
    %v119 = vadd.s32 %v110, 72
    %v120 = vadd.s32 %v110, 80
    %v121 = vadd.s32 %v110, 88
    %v122 = vadd.s32 %v110, 96
    %v123 = vadd.s32 %v110, 104
    %v124 = vadd.s32 %v110, 112
    %v125 = vadd.s32 %v110, 120
    %v126 = vlaneseq
    %v127 = vand.u32 %v126, 127
    %vm128 = vcmp.eq.s32.totalorder %v110, %v127
    %vm129 = vcmp.eq.s32.totalorder %v111, %v127
    %vm130 = vcmp.eq.s32.totalorder %v112, %v127
    %vm131 = vcmp.eq.s32.totalorder %v113, %v127
    %vm132 = vcmp.eq.s32.totalorder %v114, %v127
    %vm133 = vcmp.eq.s32.totalorder %v115, %v127
    %vm134 = vcmp.eq.s32.totalorder %v116, %v127
    %vm135 = vcmp.eq.s32.totalorder %v117, %v127
    %vm136 = vcmp.eq.s32.totalorder %v118, %v127
    %vm137 = vcmp.eq.s32.totalorder %v119, %v127
    %vm138 = vcmp.eq.s32.totalorder %v120, %v127
    %vm139 = vcmp.eq.s32.totalorder %v121, %v127
    %vm140 = vcmp.eq.s32.totalorder %v122, %v127
    %vm141 = vcmp.eq.s32.totalorder %v123, %v127
    %vm142 = vcmp.eq.s32.totalorder %v124, %v127
    %vm143 = vcmp.eq.s32.totalorder %v125, %v127
    %v144 = vsel %vm128, 1, 0
    %v145 = vsel %vm129, 1, 0
    %v146 = vsel %vm130, 1, 0
    %v147 = vsel %vm131, 1, 0
    %v148 = vsel %vm132, 1, 0
    %v149 = vsel %vm133, 1, 0
    %v150 = vsel %vm134, 1, 0
    %v151 = vsel %vm135, 1, 0
    %v152 = vsel %vm136, 1, 0
    %v153 = vsel %vm137, 1, 0
    %v154 = vsel %vm138, 1, 0
    %v155 = vsel %vm139, 1, 0
    %v156 = vsel %vm140, 1, 0
    %v157 = vsel %vm141, 1, 0
    %v158 = vsel %vm142, 1, 0
    %v159 = vsel %vm143, 1, 0
    %v160 = vcvt.s32.f32 %v144
    %v161 = vcvt.s32.f32 %v145
    %v162 = vcvt.s32.f32 %v146
    %v163 = vcvt.s32.f32 %v147
    %v164 = vcvt.s32.f32 %v148
    %v165 = vcvt.s32.f32 %v149
    %v166 = vcvt.s32.f32 %v150
    %v167 = vcvt.s32.f32 %v151
    %v168 = vcvt.s32.f32 %v152
    %v169 = vcvt.s32.f32 %v153
    %v170 = vcvt.s32.f32 %v154
    %v171 = vcvt.s32.f32 %v155
    %v172 = vcvt.s32.f32 %v156
    %v173 = vcvt.s32.f32 %v157
    %v174 = vcvt.s32.f32 %v158
    %v175 = vcvt.s32.f32 %v159
    %v176 = vstv %s44
    %v177 = vmul.f32 %v45, %v176
    %v178 = vmul.f32 %v46, %v176
    %v179 = vmul.f32 %v47, %v176
    %v180 = vmul.f32 %v48, %v176
    %v181 = vmul.f32 %v49, %v176
    %v182 = vmul.f32 %v50, %v176
    %v183 = vmul.f32 %v51, %v176
    %v184 = vmul.f32 %v52, %v176
    %v185 = vmul.f32 %v53, %v176
    %v186 = vmul.f32 %v54, %v176
    %v187 = vmul.f32 %v55, %v176
    %v188 = vmul.f32 %v56, %v176
    %v189 = vmul.f32 %v57, %v176
    %v190 = vmul.f32 %v58, %v176
    %v191 = vmul.f32 %v59, %v176
    %v192 = vmul.f32 %v60, %v176
    %v193 = vmul.f32 %v61, %v176
    %v194 = vmul.f32 %v62, %v176
    %v195 = vmul.f32 %v63, %v176
    %v196 = vmul.f32 %v64, %v176
    %v197 = vmul.f32 %v65, %v176
    %v198 = vmul.f32 %v66, %v176
    %v199 = vmul.f32 %v67, %v176
    %v200 = vmul.f32 %v68, %v176
    %v201 = vmul.f32 %v69, %v176
    %v202 = vmul.f32 %v70, %v176
    %v203 = vmul.f32 %v71, %v176
    %v204 = vmul.f32 %v72, %v176
    %v205 = vmul.f32 %v73, %v176
    %v206 = vmul.f32 %v74, %v176
    %v207 = vmul.f32 %v75, %v176
    %v208 = vmul.f32 %v76, %v176
    %v209 = vadd.f32 %v177, %v160
    %v210 = vadd.f32 %v178, %v161
    %v211 = vadd.f32 %v179, %v162
    %v212 = vadd.f32 %v180, %v163
    %v213 = vadd.f32 %v181, %v164
    %v214 = vadd.f32 %v182, %v165
    %v215 = vadd.f32 %v183, %v166
    %v216 = vadd.f32 %v184, %v167
    %v217 = vadd.f32 %v185, %v168
    %v218 = vadd.f32 %v186, %v169
    %v219 = vadd.f32 %v187, %v170
    %v220 = vadd.f32 %v188, %v171
    %v221 = vadd.f32 %v189, %v172
    %v222 = vadd.f32 %v190, %v173
    %v223 = vadd.f32 %v191, %v174
    %v224 = vadd.f32 %v192, %v175
    %v225 = vadd.f32 %v193, %v160
    %v226 = vadd.f32 %v194, %v161
    %v227 = vadd.f32 %v195, %v162
    %v228 = vadd.f32 %v196, %v163
    %v229 = vadd.f32 %v197, %v164
    %v230 = vadd.f32 %v198, %v165
    %v231 = vadd.f32 %v199, %v166
    %v232 = vadd.f32 %v200, %v167
    %v233 = vadd.f32 %v201, %v168
    %v234 = vadd.f32 %v202, %v169
    %v235 = vadd.f32 %v203, %v170
    %v236 = vadd.f32 %v204, %v171
    %v237 = vadd.f32 %v205, %v172
    %v238 = vadd.f32 %v206, %v173
    %v239 = vadd.f32 %v207, %v174
    %v240 = vadd.f32 %v208, %v175
    %241 = vmatprep.subr.mxu0 0.0
    %242 = vmatpush1.xpose.msra.mxu0 %v224
    %243 = vmatprep.subr.mxu0 0.0
    %244 = vmatpush1.xpose.msra.mxu0 %v223
    %245 = vmatprep.subr.mxu0 0.0
    %246 = vmatpush1.xpose.msra.mxu0 %v222
    %247 = vmatprep.subr.mxu0 0.0
    %248 = vmatpush1.xpose.msra.mxu0 %v221
    %249 = vmatprep.subr.mxu0 0.0
    %250 = vmatpush1.xpose.msra.mxu0 %v220
    %251 = vmatprep.subr.mxu0 0.0
    %252 = vmatpush1.xpose.msra.mxu0 %v219
    %253 = vmatprep.subr.mxu0 0.0
    %254 = vmatpush1.xpose.msra.mxu0 %v218
    %255 = vmatprep.subr.mxu0 0.0
    %256 = vmatpush1.xpose.msra.mxu0 %v217
    %257 = vmatprep.subr.mxu0 0.0
    %258 = vmatpush1.xpose.msra.mxu0 %v216
    %259 = vmatprep.subr.mxu0 0.0
    %260 = vmatpush1.xpose.msra.mxu0 %v215
    %261 = vmatprep.subr.mxu0 0.0
    %262 = vmatpush1.xpose.msra.mxu0 %v214
    %263 = vmatprep.subr.mxu0 0.0
    %264 = vmatpush1.xpose.msra.mxu0 %v213
    %265 = vmatprep.subr.mxu0 0.0
    %266 = vmatpush1.xpose.msra.mxu0 %v212
    %267 = vmatprep.subr.mxu0 0.0
    %268 = vmatpush1.xpose.msra.mxu0 %v211
    %269 = vmatprep.subr.mxu0 0.0
    %270 = vmatpush1.xpose.msra.mxu0 %v210
    %271 = vmatprep.subr.mxu0 0.0
    %272 = vmatpush1.xpose.msra.mxu0 %v209
    %273 = vmatprep.subr.mxu0 0.0
    %274 = vmatpush2.xpose.msra.mxu0 0.0
    %275 = vmatprep.subr.mxu0 0.0
    %276 = vmatpush2.xpose.msra.mxu0 0.0
    %277 = vmatprep.subr.mxu0 0.0
    %278 = vmatpush2.xpose.msra.mxu0 0.0
    %279 = vmatprep.subr.mxu0 0.0
    %280 = vmatpush2.xpose.msra.mxu0 0.0
    %281 = vmatprep.subr.mxu0 0.0
    %282 = vmatpush2.xpose.msra.mxu0 0.0
    %283 = vmatprep.subr.mxu0 0.0
    %284 = vmatpush2.xpose.msra.mxu0 0.0
    %285 = vmatprep.subr.mxu0 0.0
    %286 = vmatpush2.xpose.msra.mxu0 0.0
    %287 = vmatprep.subr.mxu0 0.0
    %288 = vmatpush2.xpose.msra.mxu0 0.0
    %289 = vmatprep.subr.mxu0 0.0
    %290 = vmatpush2.xpose.msra.mxu0 0.0
    %291 = vmatprep.subr.mxu0 0.0
    %292 = vmatpush2.xpose.msra.mxu0 0.0
    %293 = vmatprep.subr.mxu0 0.0
    %294 = vmatpush2.xpose.msra.mxu0 0.0
    %295 = vmatprep.subr.mxu0 0.0
    %296 = vmatpush2.xpose.msra.mxu0 0.0
    %297 = vmatprep.subr.mxu0 0.0
    %298 = vmatpush2.xpose.msra.mxu0 0.0
    %299 = vmatprep.subr.mxu0 0.0
    %300 = vmatpush2.xpose.msra.mxu0 0.0
    %301 = vmatprep.subr.mxu0 0.0
    %302 = vmatpush2.xpose.msra.mxu0 0.0
    %303 = vmatprep.subr.mxu0 0.0
    %304 = vmatpush2.xpose.msra.mxu0 0.0
    %305 = vmatprep.mubr.f32.mxu0 0.0
    %306 = vmatmul.mubr.f32.gmra.mxu0 %v209
    %v307 = vpop.f32.mrf.mxu0
    %v308 = vadd.f32 0.0, %v307
    %v309 = vpop.f32.mrf.mxu0
    %310 = vmatprep.mubr.f32.mxu0 0.0
    %311 = vmatmul.mubr.f32.gmra.mxu0 %v210
    %v312 = vpop.f32.mrf.mxu0
    %v313 = vadd.f32 0.0, %v312
    %v314 = vpop.f32.mrf.mxu0
    %315 = vmatprep.mubr.f32.mxu0 0.0
    %316 = vmatmul.mubr.f32.gmra.mxu0 %v211
    %v317 = vpop.f32.mrf.mxu0
    %v318 = vadd.f32 0.0, %v317
    %v319 = vpop.f32.mrf.mxu0
    %320 = vmatprep.mubr.f32.mxu0 0.0
    %321 = vmatmul.mubr.f32.gmra.mxu0 %v212
    %v322 = vpop.f32.mrf.mxu0
    %v323 = vadd.f32 0.0, %v322
    %v324 = vpop.f32.mrf.mxu0
    %325 = vmatprep.mubr.f32.mxu0 0.0
    %326 = vmatmul.mubr.f32.gmra.mxu0 %v213
    %v327 = vpop.f32.mrf.mxu0
    %v328 = vadd.f32 0.0, %v327
    %v329 = vpop.f32.mrf.mxu0
    %330 = vmatprep.mubr.f32.mxu0 0.0
    %331 = vmatmul.mubr.f32.gmra.mxu0 %v214
    %v332 = vpop.f32.mrf.mxu0
    %v333 = vadd.f32 0.0, %v332
    %v334 = vpop.f32.mrf.mxu0
    %335 = vmatprep.mubr.f32.mxu0 0.0
    %336 = vmatmul.mubr.f32.gmra.mxu0 %v215
    %v337 = vpop.f32.mrf.mxu0
    %v338 = vadd.f32 0.0, %v337
    %v339 = vpop.f32.mrf.mxu0
    %340 = vmatprep.mubr.f32.mxu0 0.0
    %341 = vmatmul.mubr.f32.gmra.mxu0 %v216
    %v342 = vpop.f32.mrf.mxu0
    %v343 = vadd.f32 0.0, %v342
    %v344 = vpop.f32.mrf.mxu0
    %345 = vmatprep.mubr.f32.mxu0 0.0
    %346 = vmatmul.mubr.f32.gmra.mxu0 %v217
    %v347 = vpop.f32.mrf.mxu0
    %v348 = vadd.f32 0.0, %v347
    %v349 = vpop.f32.mrf.mxu0
    %350 = vmatprep.mubr.f32.mxu0 0.0
    %351 = vmatmul.mubr.f32.gmra.mxu0 %v218
    %v352 = vpop.f32.mrf.mxu0
    %v353 = vadd.f32 0.0, %v352
    %v354 = vpop.f32.mrf.mxu0
    %355 = vmatprep.mubr.f32.mxu0 0.0
    %356 = vmatmul.mubr.f32.gmra.mxu0 %v219
    %v357 = vpop.f32.mrf.mxu0
    %v358 = vadd.f32 0.0, %v357
    %v359 = vpop.f32.mrf.mxu0
    %360 = vmatprep.mubr.f32.mxu0 0.0
    %361 = vmatmul.mubr.f32.gmra.mxu0 %v220
    %v362 = vpop.f32.mrf.mxu0
    %v363 = vadd.f32 0.0, %v362
    %v364 = vpop.f32.mrf.mxu0
    %365 = vmatprep.mubr.f32.mxu0 0.0
    %366 = vmatmul.mubr.f32.gmra.mxu0 %v221
    %v367 = vpop.f32.mrf.mxu0
    %v368 = vadd.f32 0.0, %v367
    %v369 = vpop.f32.mrf.mxu0
    %370 = vmatprep.mubr.f32.mxu0 0.0
    %371 = vmatmul.mubr.f32.gmra.mxu0 %v222
    %v372 = vpop.f32.mrf.mxu0
    %v373 = vadd.f32 0.0, %v372
    %v374 = vpop.f32.mrf.mxu0
    %375 = vmatprep.mubr.f32.mxu0 0.0
    %376 = vmatmul.mubr.f32.gmra.mxu0 %v223
    %v377 = vpop.f32.mrf.mxu0
    %v378 = vadd.f32 0.0, %v377
    %v379 = vpop.f32.mrf.mxu0
    %380 = vmatprep.mubr.f32.mxu0 0.0
    %381 = vmatmul.mubr.f32.gmra.mxu0 %v224
    %v382 = vpop.f32.mrf.mxu0
    %v383 = vadd.f32 0.0, %v382
    %v384 = vpop.f32.mrf.mxu0
    %385 = vdwg.mxu0
    %386 = vmatprep.subr.mxu0 0.0
    %387 = vmatpush1.xpose.msra.mxu0 %v240
    %388 = vmatprep.subr.mxu0 0.0
    %389 = vmatpush1.xpose.msra.mxu0 %v239
    %390 = vmatprep.subr.mxu0 0.0
    %391 = vmatpush1.xpose.msra.mxu0 %v238
    %392 = vmatprep.subr.mxu0 0.0
    %393 = vmatpush1.xpose.msra.mxu0 %v237
    %394 = vmatprep.subr.mxu0 0.0
    %395 = vmatpush1.xpose.msra.mxu0 %v236
    %396 = vmatprep.subr.mxu0 0.0
    %397 = vmatpush1.xpose.msra.mxu0 %v235
    %398 = vmatprep.subr.mxu0 0.0
    %399 = vmatpush1.xpose.msra.mxu0 %v234
    %400 = vmatprep.subr.mxu0 0.0
    %401 = vmatpush1.xpose.msra.mxu0 %v233
    %402 = vmatprep.subr.mxu0 0.0
    %403 = vmatpush1.xpose.msra.mxu0 %v232
    %404 = vmatprep.subr.mxu0 0.0
    %405 = vmatpush1.xpose.msra.mxu0 %v231
    %406 = vmatprep.subr.mxu0 0.0
    %407 = vmatpush1.xpose.msra.mxu0 %v230
    %408 = vmatprep.subr.mxu0 0.0
    %409 = vmatpush1.xpose.msra.mxu0 %v229
    %410 = vmatprep.subr.mxu0 0.0
    %411 = vmatpush1.xpose.msra.mxu0 %v228
    %412 = vmatprep.subr.mxu0 0.0
    %413 = vmatpush1.xpose.msra.mxu0 %v227
    %414 = vmatprep.subr.mxu0 0.0
    %415 = vmatpush1.xpose.msra.mxu0 %v226
    %416 = vmatprep.subr.mxu0 0.0
    %417 = vmatpush1.xpose.msra.mxu0 %v225
    %418 = vmatprep.subr.mxu0 0.0
    %419 = vmatpush2.xpose.msra.mxu0 0.0
    %420 = vmatprep.subr.mxu0 0.0
    %421 = vmatpush2.xpose.msra.mxu0 0.0
    %422 = vmatprep.subr.mxu0 0.0
    %423 = vmatpush2.xpose.msra.mxu0 0.0
    %424 = vmatprep.subr.mxu0 0.0
    %425 = vmatpush2.xpose.msra.mxu0 0.0
    %426 = vmatprep.subr.mxu0 0.0
    %427 = vmatpush2.xpose.msra.mxu0 0.0
    %428 = vmatprep.subr.mxu0 0.0
    %429 = vmatpush2.xpose.msra.mxu0 0.0
    %430 = vmatprep.subr.mxu0 0.0
    %431 = vmatpush2.xpose.msra.mxu0 0.0
    %432 = vmatprep.subr.mxu0 0.0
    %433 = vmatpush2.xpose.msra.mxu0 0.0
    %434 = vmatprep.subr.mxu0 0.0
    %435 = vmatpush2.xpose.msra.mxu0 0.0
    %436 = vmatprep.subr.mxu0 0.0
    %437 = vmatpush2.xpose.msra.mxu0 0.0
    %438 = vmatprep.subr.mxu0 0.0
    %439 = vmatpush2.xpose.msra.mxu0 0.0
    %440 = vmatprep.subr.mxu0 0.0
    %441 = vmatpush2.xpose.msra.mxu0 0.0
    %442 = vmatprep.subr.mxu0 0.0
    %443 = vmatpush2.xpose.msra.mxu0 0.0
    %444 = vmatprep.subr.mxu0 0.0
    %445 = vmatpush2.xpose.msra.mxu0 0.0
    %446 = vmatprep.subr.mxu0 0.0
    %447 = vmatpush2.xpose.msra.mxu0 0.0
    %448 = vmatprep.subr.mxu0 0.0
    %449 = vmatpush2.xpose.msra.mxu0 0.0
    %450 = vmatprep.mubr.f32.mxu0 0.0
    %451 = vmatmul.mubr.f32.gmra.mxu0 %v225
    %v452 = vpop.f32.mrf.mxu0
    %v453 = vadd.f32 0.0, %v452
    %v454 = vpop.f32.mrf.mxu0
    %455 = vmatprep.mubr.f32.mxu0 0.0
    %456 = vmatmul.mubr.f32.gmra.mxu0 %v226
    %v457 = vpop.f32.mrf.mxu0
    %v458 = vadd.f32 0.0, %v457
    %v459 = vpop.f32.mrf.mxu0
    %460 = vmatprep.mubr.f32.mxu0 0.0
    %461 = vmatmul.mubr.f32.gmra.mxu0 %v227
    %v462 = vpop.f32.mrf.mxu0
    %v463 = vadd.f32 0.0, %v462
    %v464 = vpop.f32.mrf.mxu0
    %465 = vmatprep.mubr.f32.mxu0 0.0
    %466 = vmatmul.mubr.f32.gmra.mxu0 %v228
    %v467 = vpop.f32.mrf.mxu0
    %v468 = vadd.f32 0.0, %v467
    %v469 = vpop.f32.mrf.mxu0
    %470 = vmatprep.mubr.f32.mxu0 0.0
    %471 = vmatmul.mubr.f32.gmra.mxu0 %v229
    %v472 = vpop.f32.mrf.mxu0
    %v473 = vadd.f32 0.0, %v472
    %v474 = vpop.f32.mrf.mxu0
    %475 = vmatprep.mubr.f32.mxu0 0.0
    %476 = vmatmul.mubr.f32.gmra.mxu0 %v230
    %v477 = vpop.f32.mrf.mxu0
    %v478 = vadd.f32 0.0, %v477
    %v479 = vpop.f32.mrf.mxu0
    %480 = vmatprep.mubr.f32.mxu0 0.0
    %481 = vmatmul.mubr.f32.gmra.mxu0 %v231
    %v482 = vpop.f32.mrf.mxu0
    %v483 = vadd.f32 0.0, %v482
    %v484 = vpop.f32.mrf.mxu0
    %485 = vmatprep.mubr.f32.mxu0 0.0
    %486 = vmatmul.mubr.f32.gmra.mxu0 %v232
    %v487 = vpop.f32.mrf.mxu0
    %v488 = vadd.f32 0.0, %v487
    %v489 = vpop.f32.mrf.mxu0
    %490 = vmatprep.mubr.f32.mxu0 0.0
    %491 = vmatmul.mubr.f32.gmra.mxu0 %v233
    %v492 = vpop.f32.mrf.mxu0
    %v493 = vadd.f32 0.0, %v492
    %v494 = vpop.f32.mrf.mxu0
    %495 = vmatprep.mubr.f32.mxu0 0.0
    %496 = vmatmul.mubr.f32.gmra.mxu0 %v234
    %v497 = vpop.f32.mrf.mxu0
    %v498 = vadd.f32 0.0, %v497
    %v499 = vpop.f32.mrf.mxu0
    %500 = vmatprep.mubr.f32.mxu0 0.0
    %501 = vmatmul.mubr.f32.gmra.mxu0 %v235
    %v502 = vpop.f32.mrf.mxu0
    %v503 = vadd.f32 0.0, %v502
    %v504 = vpop.f32.mrf.mxu0
    %505 = vmatprep.mubr.f32.mxu0 0.0
    %506 = vmatmul.mubr.f32.gmra.mxu0 %v236
    %v507 = vpop.f32.mrf.mxu0
    %v508 = vadd.f32 0.0, %v507
    %v509 = vpop.f32.mrf.mxu0
    %510 = vmatprep.mubr.f32.mxu0 0.0
    %511 = vmatmul.mubr.f32.gmra.mxu0 %v237
    %v512 = vpop.f32.mrf.mxu0
    %v513 = vadd.f32 0.0, %v512
    %v514 = vpop.f32.mrf.mxu0
    %515 = vmatprep.mubr.f32.mxu0 0.0
    %516 = vmatmul.mubr.f32.gmra.mxu0 %v238
    %v517 = vpop.f32.mrf.mxu0
    %v518 = vadd.f32 0.0, %v517
    %v519 = vpop.f32.mrf.mxu0
    %520 = vmatprep.mubr.f32.mxu0 0.0
    %521 = vmatmul.mubr.f32.gmra.mxu0 %v239
    %v522 = vpop.f32.mrf.mxu0
    %v523 = vadd.f32 0.0, %v522
    %v524 = vpop.f32.mrf.mxu0
    %525 = vmatprep.mubr.f32.mxu0 0.0
    %526 = vmatmul.mubr.f32.gmra.mxu0 %v240
    %v527 = vpop.f32.mrf.mxu0
    %v528 = vadd.f32 0.0, %v527
    %v529 = vpop.f32.mrf.mxu0
    %530 = vdwg.mxu0
    %531 = vmatprep.subr.mxu0 0.0
    %532 = vmatpush1.msra.mxu0 %v92
    %533 = vmatprep.subr.mxu0 0.0
    %534 = vmatpush1.msra.mxu0 %v91
    %535 = vmatprep.subr.mxu0 0.0
    %536 = vmatpush1.msra.mxu0 %v90
    %537 = vmatprep.subr.mxu0 0.0
    %538 = vmatpush1.msra.mxu0 %v89
    %539 = vmatprep.subr.mxu0 0.0
    %540 = vmatpush1.msra.mxu0 %v88
    %541 = vmatprep.subr.mxu0 0.0
    %542 = vmatpush1.msra.mxu0 %v87
    %543 = vmatprep.subr.mxu0 0.0
    %544 = vmatpush1.msra.mxu0 %v86
    %545 = vmatprep.subr.mxu0 0.0
    %546 = vmatpush1.msra.mxu0 %v85
    %547 = vmatprep.subr.mxu0 0.0
    %548 = vmatpush1.msra.mxu0 %v84
    %549 = vmatprep.subr.mxu0 0.0
    %550 = vmatpush1.msra.mxu0 %v83
    %551 = vmatprep.subr.mxu0 0.0
    %552 = vmatpush1.msra.mxu0 %v82
    %553 = vmatprep.subr.mxu0 0.0
    %554 = vmatpush1.msra.mxu0 %v81
    %555 = vmatprep.subr.mxu0 0.0
    %556 = vmatpush1.msra.mxu0 %v80
    %557 = vmatprep.subr.mxu0 0.0
    %558 = vmatpush1.msra.mxu0 %v79
    %559 = vmatprep.subr.mxu0 0.0
    %560 = vmatpush1.msra.mxu0 %v78
    %561 = vmatprep.subr.mxu0 0.0
    %562 = vmatpush1.msra.mxu0 %v77
    %563 = vmatprep.subr.mxu0 0.0
    %564 = vmatpush2.msra.mxu0 0.0
    %565 = vmatprep.subr.mxu0 0.0
    %566 = vmatpush2.msra.mxu0 0.0
    %567 = vmatprep.subr.mxu0 0.0
    %568 = vmatpush2.msra.mxu0 0.0
    %569 = vmatprep.subr.mxu0 0.0
    %570 = vmatpush2.msra.mxu0 0.0
    %571 = vmatprep.subr.mxu0 0.0
    %572 = vmatpush2.msra.mxu0 0.0
    %573 = vmatprep.subr.mxu0 0.0
    %574 = vmatpush2.msra.mxu0 0.0
    %575 = vmatprep.subr.mxu0 0.0
    %576 = vmatpush2.msra.mxu0 0.0
    %577 = vmatprep.subr.mxu0 0.0
    %578 = vmatpush2.msra.mxu0 0.0
    %579 = vmatprep.subr.mxu0 0.0
    %580 = vmatpush2.msra.mxu0 0.0
    %581 = vmatprep.subr.mxu0 0.0
    %582 = vmatpush2.msra.mxu0 0.0
    %583 = vmatprep.subr.mxu0 0.0
    %584 = vmatpush2.msra.mxu0 0.0
    %585 = vmatprep.subr.mxu0 0.0
    %586 = vmatpush2.msra.mxu0 0.0
    %587 = vmatprep.subr.mxu0 0.0
    %588 = vmatpush2.msra.mxu0 0.0
    %589 = vmatprep.subr.mxu0 0.0
    %590 = vmatpush2.msra.mxu0 0.0
    %591 = vmatprep.subr.mxu0 0.0
    %592 = vmatpush2.msra.mxu0 0.0
    %593 = vmatprep.subr.mxu0 0.0
    %594 = vmatpush2.msra.mxu0 0.0
    %595 = vmatprep.mubr.f32.mxu0 0.0
    %596 = vmatmul.mubr.f32.gmra.mxu0 %v308
    %v597 = vpop.f32.mrf.mxu0
    %v598 = vadd.f32 0.0, %v597
    %v599 = vpop.f32.mrf.mxu0
    %600 = vmatprep.mubr.f32.mxu0 0.0
    %601 = vmatmul.mubr.f32.gmra.mxu0 %v313
    %v602 = vpop.f32.mrf.mxu0
    %v603 = vadd.f32 0.0, %v602
    %v604 = vpop.f32.mrf.mxu0
    %605 = vmatprep.mubr.f32.mxu0 0.0
    %606 = vmatmul.mubr.f32.gmra.mxu0 %v318
    %v607 = vpop.f32.mrf.mxu0
    %v608 = vadd.f32 0.0, %v607
    %v609 = vpop.f32.mrf.mxu0
    %610 = vmatprep.mubr.f32.mxu0 0.0
    %611 = vmatmul.mubr.f32.gmra.mxu0 %v323
    %v612 = vpop.f32.mrf.mxu0
    %v613 = vadd.f32 0.0, %v612
    %v614 = vpop.f32.mrf.mxu0
    %615 = vmatprep.mubr.f32.mxu0 0.0
    %616 = vmatmul.mubr.f32.gmra.mxu0 %v328
    %v617 = vpop.f32.mrf.mxu0
    %v618 = vadd.f32 0.0, %v617
    %v619 = vpop.f32.mrf.mxu0
    %620 = vmatprep.mubr.f32.mxu0 0.0
    %621 = vmatmul.mubr.f32.gmra.mxu0 %v333
    %v622 = vpop.f32.mrf.mxu0
    %v623 = vadd.f32 0.0, %v622
    %v624 = vpop.f32.mrf.mxu0
    %625 = vmatprep.mubr.f32.mxu0 0.0
    %626 = vmatmul.mubr.f32.gmra.mxu0 %v338
    %v627 = vpop.f32.mrf.mxu0
    %v628 = vadd.f32 0.0, %v627
    %v629 = vpop.f32.mrf.mxu0
    %630 = vmatprep.mubr.f32.mxu0 0.0
    %631 = vmatmul.mubr.f32.gmra.mxu0 %v343
    %v632 = vpop.f32.mrf.mxu0
    %v633 = vadd.f32 0.0, %v632
    %v634 = vpop.f32.mrf.mxu0
    %635 = vmatprep.mubr.f32.mxu0 0.0
    %636 = vmatmul.mubr.f32.gmra.mxu0 %v348
    %v637 = vpop.f32.mrf.mxu0
    %v638 = vadd.f32 0.0, %v637
    %v639 = vpop.f32.mrf.mxu0
    %640 = vmatprep.mubr.f32.mxu0 0.0
    %641 = vmatmul.mubr.f32.gmra.mxu0 %v353
    %v642 = vpop.f32.mrf.mxu0
    %v643 = vadd.f32 0.0, %v642
    %v644 = vpop.f32.mrf.mxu0
    %645 = vmatprep.mubr.f32.mxu0 0.0
    %646 = vmatmul.mubr.f32.gmra.mxu0 %v358
    %v647 = vpop.f32.mrf.mxu0
    %v648 = vadd.f32 0.0, %v647
    %v649 = vpop.f32.mrf.mxu0
    %650 = vmatprep.mubr.f32.mxu0 0.0
    %651 = vmatmul.mubr.f32.gmra.mxu0 %v363
    %v652 = vpop.f32.mrf.mxu0
    %v653 = vadd.f32 0.0, %v652
    %v654 = vpop.f32.mrf.mxu0
    %655 = vmatprep.mubr.f32.mxu0 0.0
    %656 = vmatmul.mubr.f32.gmra.mxu0 %v368
    %v657 = vpop.f32.mrf.mxu0
    %v658 = vadd.f32 0.0, %v657
    %v659 = vpop.f32.mrf.mxu0
    %660 = vmatprep.mubr.f32.mxu0 0.0
    %661 = vmatmul.mubr.f32.gmra.mxu0 %v373
    %v662 = vpop.f32.mrf.mxu0
    %v663 = vadd.f32 0.0, %v662
    %v664 = vpop.f32.mrf.mxu0
    %665 = vmatprep.mubr.f32.mxu0 0.0
    %666 = vmatmul.mubr.f32.gmra.mxu0 %v378
    %v667 = vpop.f32.mrf.mxu0
    %v668 = vadd.f32 0.0, %v667
    %v669 = vpop.f32.mrf.mxu0
    %670 = vmatprep.mubr.f32.mxu0 0.0
    %671 = vmatmul.mubr.f32.gmra.mxu0 %v383
    %v672 = vpop.f32.mrf.mxu0
    %v673 = vadd.f32 0.0, %v672
    %v674 = vpop.f32.mrf.mxu0
    %675 = vdwg.mxu0
    %676 = vmatprep.subr.mxu0 0.0
    %677 = vmatpush1.msra.mxu0 %v108
    %678 = vmatprep.subr.mxu0 0.0
    %679 = vmatpush1.msra.mxu0 %v107
    %680 = vmatprep.subr.mxu0 0.0
    %681 = vmatpush1.msra.mxu0 %v106
    %682 = vmatprep.subr.mxu0 0.0
    %683 = vmatpush1.msra.mxu0 %v105
    %684 = vmatprep.subr.mxu0 0.0
    %685 = vmatpush1.msra.mxu0 %v104
    %686 = vmatprep.subr.mxu0 0.0
    %687 = vmatpush1.msra.mxu0 %v103
    %688 = vmatprep.subr.mxu0 0.0
    %689 = vmatpush1.msra.mxu0 %v102
    %690 = vmatprep.subr.mxu0 0.0
    %691 = vmatpush1.msra.mxu0 %v101
    %692 = vmatprep.subr.mxu0 0.0
    %693 = vmatpush1.msra.mxu0 %v100
    %694 = vmatprep.subr.mxu0 0.0
    %695 = vmatpush1.msra.mxu0 %v99
    %696 = vmatprep.subr.mxu0 0.0
    %697 = vmatpush1.msra.mxu0 %v98
    %698 = vmatprep.subr.mxu0 0.0
    %699 = vmatpush1.msra.mxu0 %v97
    %700 = vmatprep.subr.mxu0 0.0
    %701 = vmatpush1.msra.mxu0 %v96
    %702 = vmatprep.subr.mxu0 0.0
    %703 = vmatpush1.msra.mxu0 %v95
    %704 = vmatprep.subr.mxu0 0.0
    %705 = vmatpush1.msra.mxu0 %v94
    %706 = vmatprep.subr.mxu0 0.0
    %707 = vmatpush1.msra.mxu0 %v93
    %708 = vmatprep.subr.mxu0 0.0
    %709 = vmatpush2.msra.mxu0 0.0
    %710 = vmatprep.subr.mxu0 0.0
    %711 = vmatpush2.msra.mxu0 0.0
    %712 = vmatprep.subr.mxu0 0.0
    %713 = vmatpush2.msra.mxu0 0.0
    %714 = vmatprep.subr.mxu0 0.0
    %715 = vmatpush2.msra.mxu0 0.0
    %716 = vmatprep.subr.mxu0 0.0
    %717 = vmatpush2.msra.mxu0 0.0
    %718 = vmatprep.subr.mxu0 0.0
    %719 = vmatpush2.msra.mxu0 0.0
    %720 = vmatprep.subr.mxu0 0.0
    %721 = vmatpush2.msra.mxu0 0.0
    %722 = vmatprep.subr.mxu0 0.0
    %723 = vmatpush2.msra.mxu0 0.0
    %724 = vmatprep.subr.mxu0 0.0
    %725 = vmatpush2.msra.mxu0 0.0
    %726 = vmatprep.subr.mxu0 0.0
    %727 = vmatpush2.msra.mxu0 0.0
    %728 = vmatprep.subr.mxu0 0.0
    %729 = vmatpush2.msra.mxu0 0.0
    %730 = vmatprep.subr.mxu0 0.0
    %731 = vmatpush2.msra.mxu0 0.0
    %732 = vmatprep.subr.mxu0 0.0
    %733 = vmatpush2.msra.mxu0 0.0
    %734 = vmatprep.subr.mxu0 0.0
    %735 = vmatpush2.msra.mxu0 0.0
    %736 = vmatprep.subr.mxu0 0.0
    %737 = vmatpush2.msra.mxu0 0.0
    %738 = vmatprep.subr.mxu0 0.0
    %739 = vmatpush2.msra.mxu0 0.0
    %740 = vmatprep.mubr.f32.mxu0 0.0
    %741 = vmatmul.mubr.f32.gmra.mxu0 %v453
    %v742 = vpop.f32.mrf.mxu0
    %v743 = vadd.f32 0.0, %v742
    %v744 = vpop.f32.mrf.mxu0
    %745 = vmatprep.mubr.f32.mxu0 0.0
    %746 = vmatmul.mubr.f32.gmra.mxu0 %v458
    %v747 = vpop.f32.mrf.mxu0
    %v748 = vadd.f32 0.0, %v747
    %v749 = vpop.f32.mrf.mxu0
    %750 = vmatprep.mubr.f32.mxu0 0.0
    %751 = vmatmul.mubr.f32.gmra.mxu0 %v463
    %v752 = vpop.f32.mrf.mxu0
    %v753 = vadd.f32 0.0, %v752
    %v754 = vpop.f32.mrf.mxu0
    %755 = vmatprep.mubr.f32.mxu0 0.0
    %756 = vmatmul.mubr.f32.gmra.mxu0 %v468
    %v757 = vpop.f32.mrf.mxu0
    %v758 = vadd.f32 0.0, %v757
    %v759 = vpop.f32.mrf.mxu0
    %760 = vmatprep.mubr.f32.mxu0 0.0
    %761 = vmatmul.mubr.f32.gmra.mxu0 %v473
    %v762 = vpop.f32.mrf.mxu0
    %v763 = vadd.f32 0.0, %v762
    %v764 = vpop.f32.mrf.mxu0
    %765 = vmatprep.mubr.f32.mxu0 0.0
    %766 = vmatmul.mubr.f32.gmra.mxu0 %v478
    %v767 = vpop.f32.mrf.mxu0
    %v768 = vadd.f32 0.0, %v767
    %v769 = vpop.f32.mrf.mxu0
    %770 = vmatprep.mubr.f32.mxu0 0.0
    %771 = vmatmul.mubr.f32.gmra.mxu0 %v483
    %v772 = vpop.f32.mrf.mxu0
    %v773 = vadd.f32 0.0, %v772
    %v774 = vpop.f32.mrf.mxu0
    %775 = vmatprep.mubr.f32.mxu0 0.0
    %776 = vmatmul.mubr.f32.gmra.mxu0 %v488
    %v777 = vpop.f32.mrf.mxu0
    %v778 = vadd.f32 0.0, %v777
    %v779 = vpop.f32.mrf.mxu0
    %780 = vmatprep.mubr.f32.mxu0 0.0
    %781 = vmatmul.mubr.f32.gmra.mxu0 %v493
    %v782 = vpop.f32.mrf.mxu0
    %v783 = vadd.f32 0.0, %v782
    %v784 = vpop.f32.mrf.mxu0
    %785 = vmatprep.mubr.f32.mxu0 0.0
    %786 = vmatmul.mubr.f32.gmra.mxu0 %v498
    %v787 = vpop.f32.mrf.mxu0
    %v788 = vadd.f32 0.0, %v787
    %v789 = vpop.f32.mrf.mxu0
    %790 = vmatprep.mubr.f32.mxu0 0.0
    %791 = vmatmul.mubr.f32.gmra.mxu0 %v503
    %v792 = vpop.f32.mrf.mxu0
    %v793 = vadd.f32 0.0, %v792
    %v794 = vpop.f32.mrf.mxu0
    %795 = vmatprep.mubr.f32.mxu0 0.0
    %796 = vmatmul.mubr.f32.gmra.mxu0 %v508
    %v797 = vpop.f32.mrf.mxu0
    %v798 = vadd.f32 0.0, %v797
    %v799 = vpop.f32.mrf.mxu0
    %800 = vmatprep.mubr.f32.mxu0 0.0
    %801 = vmatmul.mubr.f32.gmra.mxu0 %v513
    %v802 = vpop.f32.mrf.mxu0
    %v803 = vadd.f32 0.0, %v802
    %v804 = vpop.f32.mrf.mxu0
    %805 = vmatprep.mubr.f32.mxu0 0.0
    %806 = vmatmul.mubr.f32.gmra.mxu0 %v518
    %v807 = vpop.f32.mrf.mxu0
    %v808 = vadd.f32 0.0, %v807
    %v809 = vpop.f32.mrf.mxu0
    %810 = vmatprep.mubr.f32.mxu0 0.0
    %811 = vmatmul.mubr.f32.gmra.mxu0 %v523
    %v812 = vpop.f32.mrf.mxu0
    %v813 = vadd.f32 0.0, %v812
    %v814 = vpop.f32.mrf.mxu0
    %815 = vmatprep.mubr.f32.mxu0 0.0
    %816 = vmatmul.mubr.f32.gmra.mxu0 %v528
    %v817 = vpop.f32.mrf.mxu0
    %v818 = vadd.f32 0.0, %v817
    %v819 = vpop.f32.mrf.mxu0
    %820 = vdwg.mxu0
    %821 = vst [vmem:[#allocation8] sm:$0xff] %v598
    %822 = vst [vmem:[#allocation8 + $0x8] sm:$0xff] %v603
    %823 = vst [vmem:[#allocation8 + $0x10] sm:$0xff] %v608
    %824 = vst [vmem:[#allocation8 + $0x18] sm:$0xff] %v613
    %825 = vst [vmem:[#allocation8 + $0x20] sm:$0xff] %v618
    %826 = vst [vmem:[#allocation8 + $0x28] sm:$0xff] %v623
    %827 = vst [vmem:[#allocation8 + $0x30] sm:$0xff] %v628
    %828 = vst [vmem:[#allocation8 + $0x38] sm:$0xff] %v633
    %829 = vst [vmem:[#allocation8 + $0x40] sm:$0xff] %v638
    %830 = vst [vmem:[#allocation8 + $0x48] sm:$0xff] %v643
    %831 = vst [vmem:[#allocation8 + $0x50] sm:$0xff] %v648
    %832 = vst [vmem:[#allocation8 + $0x58] sm:$0xff] %v653
    %833 = vst [vmem:[#allocation8 + $0x60] sm:$0xff] %v658
    %834 = vst [vmem:[#allocation8 + $0x68] sm:$0xff] %v663
    %835 = vst [vmem:[#allocation8 + $0x70] sm:$0xff] %v668
    %836 = vst [vmem:[#allocation8 + $0x78] sm:$0xff] %v673
    %837 = vst [vmem:[#allocation8 + $0x80] sm:$0xff] %v743
    %838 = vst [vmem:[#allocation8 + $0x88] sm:$0xff] %v748
    %839 = vst [vmem:[#allocation8 + $0x90] sm:$0xff] %v753
    %840 = vst [vmem:[#allocation8 + $0x98] sm:$0xff] %v758
    %841 = vst [vmem:[#allocation8 + $0xa0] sm:$0xff] %v763
    %842 = vst [vmem:[#allocation8 + $0xa8] sm:$0xff] %v768
    %843 = vst [vmem:[#allocation8 + $0xb0] sm:$0xff] %v773
    %844 = vst [vmem:[#allocation8 + $0xb8] sm:$0xff] %v778
    %845 = vst [vmem:[#allocation8 + $0xc0] sm:$0xff] %v783
    %846 = vst [vmem:[#allocation8 + $0xc8] sm:$0xff] %v788
    %847 = vst [vmem:[#allocation8 + $0xd0] sm:$0xff] %v793
    %848 = vst [vmem:[#allocation8 + $0xd8] sm:$0xff] %v798
    %849 = vst [vmem:[#allocation8 + $0xe0] sm:$0xff] %v803
    %850 = vst [vmem:[#allocation8 + $0xe8] sm:$0xff] %v808
    %851 = vst [vmem:[#allocation8 + $0xf0] sm:$0xff] %v813
    %852 = vst [vmem:[#allocation8 + $0xf8] sm:$0xff] %v818
    // Predicated region
    $region22: #{tpu_custom_call.1} parent=1 // pred_check
      _
    $region23: #{tpu_custom_call.1} parent=1 // pred_check_branch
      %854 = sbr.rel (0) target = $region25
    $region24: #{tpu_custom_call.1} parent=1 // pred_region
      %s856 = ssub.s32 4096, 4096
      %857 = vsyncadd [#allocation5], %s856
      %s858 = sshll.u32 [#allocation8], 4
      %s859 = int_to_ptr.vmem [resolvable:$true] %s858
      %864 = dma.vmem_to_hbm [thread:$0]  %s859, 4096, %s3, [#allocation5], 128, 128, 8
    $region25: #{tpu_custom_call.1} parent=1 // pred_fallthru
      _
    // Predicated region
    $region26: #{tpu_custom_call.1} parent=1 // pred_check
      _
    $region27: #{tpu_custom_call.1} parent=1 // pred_check_branch
      %866 = sbr.rel (0) target = $region29
    $region28: #{tpu_custom_call.1} parent=1 // pred_region
      %867 = dma.done [#allocation5], 4096
    $region29: #{tpu_custom_call.1} parent=1 // pred_fallthru
      _
    %868 = vsyncpa [#allocation4], 1
    %869 = vsyncpa [#allocation7], 1
    %870 = vsyncpa [#allocation5], 1

</llo_original>
